<compile_context>
chip_gen: v7x
topology: tpu7x:2x2x1
jax: 0.10.0
libtpu: 0.0.40
codegen_flags: <defaults>
</compile_context>

<pallas_src>
import jax
import jax.numpy as jnp
from jax.experimental import pallas as pl
from jax.experimental.pallas import tpu as pltpu


def _always_copy_kernel(val_ref, out_ref, sem):
    # Single HBM->HBM DMA of the whole array: no VMEM round-trip, no vld/vst.
    cp = pltpu.make_async_copy(val_ref, out_ref, sem)
    cp.start()
    cp.wait()


def _always_materialize(val):
    """Produce a fresh buffer holding `val` via one grid-less HBM->HBM DMA."""
    return pl.pallas_call(
        _always_copy_kernel,
        out_shape=jax.ShapeDtypeStruct(val.shape, val.dtype),
        in_specs=[pl.BlockSpec(memory_space=pl.ANY)],   # val stays in HBM
        out_specs=pl.BlockSpec(memory_space=pl.ANY),    # out written by DMA
        scratch_shapes=[pltpu.SemaphoreType.DMA(())],
    )(val)


def always_forward(x, val, *, materialize=False):
    """Pallas equivalent of Always(val)(x): returns `val`, ignoring `x`.

    `x` is dropped before any kernel is built (mirrors `del x`), so no
    scheduling dependency on x's producer is created. The default path
    returns `val` directly -- the semantically exact, zero-cost answer.
    Set materialize=True only if a distinct output buffer is required; that
    path is a single HBM->HBM DMA with no VMEM footprint and no grid.
    """
    del x
    val = jnp.asarray(val)
    if not materialize:
        return val
    return _always_materialize(val)


class AlwaysPallas:
    """Mirror of the PyTorch `Always` module."""

    def __init__(self, val, *, materialize=False):
        self.val = jnp.asarray(val)
        self.materialize = materialize

    def __call__(self, x):
        return always_forward(x, self.val, materialize=self.materialize)


if __name__ == "__main__":
    key = jax.random.PRNGKey(0)
    kx, kv, kv2 = jax.random.split(key, 3)

    # Input x (NCHW, ignored by the module) and the constant `val`.
    x = jax.random.normal(kx, (2, 4, 16, 16), dtype=jnp.float32)
    val = jax.random.normal(kv, (8, 128), dtype=jnp.float32)

    # Default (no-kernel) path: exact passthrough semantics.
    module = AlwaysPallas(val)
    out = jax.block_until_ready(module(x))
    assert out.shape == val.shape and out.dtype == val.dtype
    assert bool(jnp.array_equal(out, val))

    # Changing x must not change the output.
    out2 = jax.block_until_ready(module(x + 123.0))
    assert bool(jnp.array_equal(out2, val))

    # Kernel path (fresh buffer via single HBM->HBM DMA), small val.
    module_copy = AlwaysPallas(val, materialize=True)
    out_copy = jax.block_until_ready(module_copy(x))
    assert out_copy.shape == val.shape and out_copy.dtype == val.dtype
    assert bool(jnp.array_equal(out_copy, val))

    # Kernel path with a larger val to exercise a bigger DMA.
    val_big = jax.random.normal(kv2, (1024, 256), dtype=jnp.float32)
    out_big = jax.block_until_ready(
        AlwaysPallas(val_big, materialize=True)(x))
    assert bool(jnp.array_equal(out_big, val_big))

    print("KERNEL_OK")
</pallas_src>

<mosaic_0001>
module attributes {stable_mosaic.version = 11 : i64} {
  func.func @_always_copy_kernel(%arg0: memref<8x128xf32, #tpu.memory_space<any>>, %arg1: memref<8x128xf32, #tpu.memory_space<any>>, %arg2: memref<!tpu.dma_semaphore, #tpu.memory_space<semaphore_mem>>) attributes {dimension_semantics = [], scalar_prefetch = 0 : i64, scratch_operands = 1 : i64, tpu.core_type = #tpu.core_type<tc>} {
    tpu.enqueue_dma source(%arg0 : memref<8x128xf32, #tpu.memory_space<any>>) target(%arg1 : memref<8x128xf32, #tpu.memory_space<any>>) target_semaphore(%arg2 : memref<!tpu.dma_semaphore, #tpu.memory_space<semaphore_mem>>)
    tpu.wait_dma2 semaphore(%arg2 : memref<!tpu.dma_semaphore, #tpu.memory_space<semaphore_mem>>) src(%arg0 : memref<8x128xf32, #tpu.memory_space<any>>) dst(%arg1 : memref<8x128xf32, #tpu.memory_space<any>>)
    return
  }
}

</mosaic_0001>

<llo_original>
// kernel: tpu_custom_call.1
$region0: #{tpu_custom_call.1}
  #allocation0 [shape = 'u32[]', space=smem, size = 0x4, offset = 0x4, fixed_abs, tag = 'smem constant byte address 0x4 - core index']
  #allocation1 [shape = 'u32[144,128]{1,0:T(1,128)}', space=vmem, size = 0x12000, scoped, tag = 'internal scratch']
  #allocation2 [shape = 's32[1]{0}', space=sflag, size = 0x4, scoped, tag = 'scratch operand']
  #allocation3 [shape = 's32[]', space=sflag, size = 0x4, offset = 0, fixed_abs, tag = 'sflag constant byte address 0x0 - dummy sync flag']
  #allocation4 [shape = 'u32[0]{0}', space=smem, size = 0, offset = 0, fixed_abs, tag = 'smem constant byte address 0x0 - null']
  %s0 = inlined_call_operand.hbm [shape: f32[8,128], index: 0, kind: input, shape index: {}]
  %s1 = inlined_call_operand.hbm [shape: f32[8,128], index: 1, kind: output, shape index: {}]
  %s2 = sld [smem:[#allocation0]]
  $region2: #{tpu_custom_call.1} parent=0
    _
  %s4 = ssub.s32 1, %s2
  %s5 = scalar_select 0, %s4, %s2
  %s7 = sshll.u32 1, 14
  %s8 = sxor.u32 4294967295, %s7
  %s11 = sshll.u32 3, 24
  %s12 = sxor.u32 4294967295, %s11
  %s13 = sand.u32 0, %s12
  %s15 = sor.u32 %s13, 0
  %18 = dma.general %s0, 128, %s1, [#allocation2], [#allocation3], [#allocation4], %s15, 0
  %s19 = smul.u32 8, 1
  %s20 = sshll.u32 %s19, 4
  %21 = dma.done [#allocation2], %s20
  %22 = vsyncmov [#allocation2]
  %s23 = vpop.sfrf %22
  %p24 = scmp.eq.s32.totalorder %s23, 0
  %p25 = pneg %p24
  %27 = shalt.err (%p25)

</llo_original>
